<compile_context>
chip_gen: v7x
topology: tpu7x:2x2x1
jax: 0.10.0
libtpu: 0.0.40
codegen_flags: <defaults>
</compile_context>

<pallas_src>
import jax
import jax.numpy as jnp
from jax.experimental import pallas as pl
from jax.experimental.pallas import tpu as pltpu


def _round_up(x, m):
    return (x + m - 1) // m * m


def _pick_tile_n(n):
    """Lane-dense column tile.  Prefer >=2 grid steps along the 'parallel'
    axis (v7x has 2 TensorCores) while keeping last-tile padding waste low."""
    for cand in (1024, 512, 256):
        n_pad = _round_up(n, cand)
        if n_pad // cand >= 2 and (n_pad - n) * 8 <= n_pad:
            return cand
    return 128


def _pick_tile_k(k):
    """K (contraction) tile: <=512 rows/step, multiple of 16 (bf16 sublane
    packing); Kp = TK * nk with minimal padding."""
    nk = max(1, -(-k // 512))          # ceil(K / 512) steps
    tk = _round_up(-(-k // nk), 16)    # per-step rows, bf16-sublane aligned
    return tk, nk


# ----------------------------------------------------------------------------
# Kernel: K-tiled, lane-dense matmul tile of the (transposed) conv
# ----------------------------------------------------------------------------
def _conv_mm_kernel(xt_ref, wt_ref, b_ref, o_ref, acc_ref):
    # xt_ref : (TK, TN)  bf16  -- K-tile of transposed im2col columns
    # wt_ref : (Cp, TK)  bf16  -- K-tile of transposed weight matrix
    # b_ref  : (Cp, 1)   f32   -- bias (broadcast over columns)
    # o_ref  : (Cp, TN)  out   -- transposed output tile (unmasked lane stores)
    # acc_ref: (Cp, TN)  f32   -- VMEM accumulator, resident across k steps
    k = pl.program_id(1)

    @pl.when(k == 0)
    def _init():
        acc_ref[...] = jnp.zeros_like(acc_ref)

    acc_ref[...] += jnp.dot(wt_ref[...], xt_ref[...],
                            preferred_element_type=jnp.float32)

    @pl.when(k == pl.num_programs(1) - 1)
    def _finalize():
        o_ref[...] = (acc_ref[...] + b_ref[...]).astype(o_ref.dtype)


# ----------------------------------------------------------------------------
# DownsampleBlock forward:  y = Conv2d(x, w(3x3), b, stride, padding)   (NCHW)
# ----------------------------------------------------------------------------
def downsample_block_forward(x_nchw, weight, bias, *, stride, padding,
                             out_dtype=jnp.float32):
    B, Cin, H, W = x_nchw.shape
    Cout = weight.shape[0]
    KH = KW = 3
    Ho = (H + 2 * padding - KH) // stride + 1
    Wo = (W + 2 * padding - KW) // stride + 1
    N = B * Ho * Wo          # output pixels across the batch (lane axis)
    K = KH * KW * Cin        # contraction size (tap-major, cin-minor)

    TN = _pick_tile_n(N)
    TK, nk = _pick_tile_k(K)
    Np = _round_up(N, TN)
    Kp = TK * nk
    Cp = _round_up(Cout, 16)

    # ---- layout-only glue, bf16 end-to-end (cast FIRST, then pad/slice) -----
    xb = x_nchw.astype(jnp.bfloat16)
    xp = jnp.pad(xb, ((0, 0), (0, 0), (padding, padding), (padding, padding)))
    taps = []
    for dy in range(KH):
        for dx in range(KW):
            taps.append(xp[:, :, dy::stride, dx::stride][:, :, :Ho, :Wo])
    xt = jnp.stack(taps, axis=0)                       # (9, B, Cin, Ho, Wo)
    xt = jnp.transpose(xt, (0, 2, 1, 3, 4)).reshape(K, N)   # rows=(tap,cin)
    xt = jnp.pad(xt, ((0, Kp - K), (0, Np - N)))

    # weight (Cout, Cin, 3, 3) -> W^T (Cout, 9*Cin) with matching (tap,cin) order
    wt = jnp.transpose(weight, (0, 2, 3, 1)).reshape(Cout, K).astype(jnp.bfloat16)
    wt = jnp.pad(wt, ((0, Cp - Cout), (0, Kp - K)))
    bb = jnp.pad(bias.astype(jnp.float32), (0, Cp - Cout)).reshape(Cp, 1)

    out_isz = jnp.dtype(out_dtype).itemsize
    vmem_bytes = (2 * TK * TN * 2          # xt block, double-buffered (bf16)
                  + 2 * Cp * TK * 2        # wt block, double-buffered (bf16)
                  + 2 * Cp * 4             # bias
                  + 2 * Cp * TN * out_isz  # out block, double-buffered
                  + Cp * TN * 4)           # f32 accumulator scratch
    vmem_limit = int(min(max(2 * vmem_bytes, 16 * 1024 * 1024),
                         64 * 1024 * 1024))

    cost = pl.CostEstimate(
        flops=2 * K * Cout * N,
        transcendentals=0,
        bytes_accessed=int(Kp * Np * 2 + Cp * Kp * 2 + Cp * 4
                           + Cp * Np * out_isz))

    yt = pl.pallas_call(
        _conv_mm_kernel,
        out_shape=jax.ShapeDtypeStruct((Cp, Np), out_dtype),
        grid=(Np // TN, nk),                              # reduction axis last
        in_specs=[
            pl.BlockSpec((TK, TN), lambda n, k: (k, n)),  # activation columns
            pl.BlockSpec((Cp, TK), lambda n, k: (0, k)),  # weight K-tile
            pl.BlockSpec((Cp, 1), lambda n, k: (0, 0)),   # bias (resident)
        ],
        out_specs=pl.BlockSpec((Cp, TN), lambda n, k: (0, n)),
        scratch_shapes=[pltpu.VMEM((Cp, TN), jnp.float32)],
        compiler_params=pltpu.CompilerParams(
            dimension_semantics=("parallel", "arbitrary"),
            vmem_limit_bytes=vmem_limit),
        cost_estimate=cost,
    )(xt, wt, bb)

    # ---- un-pad and restore NCHW (a fused consumer could skip this) ----------
    y = yt[:Cout, :N].reshape(Cout, B, Ho, Wo)
    return jnp.transpose(y, (1, 0, 2, 3))


if __name__ == "__main__":
    B, Cin, H, W = 2, 4, 16, 16
    Cout, stride, padding = 32, 2, 1

    key = jax.random.PRNGKey(0)
    kx, kw, kb = jax.random.split(key, 3)
    x = jax.random.normal(kx, (B, Cin, H, W), jnp.float32)
    weight = jax.random.normal(kw, (Cout, Cin, 3, 3), jnp.float32) / jnp.sqrt(9.0 * Cin)
    bias = 0.01 * jax.random.normal(kb, (Cout,), jnp.float32)

    fwd = jax.jit(downsample_block_forward,
                  static_argnames=("stride", "padding", "out_dtype"))
    out = fwd(x, weight, bias, stride=stride, padding=padding)
    out = jax.block_until_ready(out)

    # Reference conv (plain XLA) to validate semantics (bf16-matmul tolerance).
    ref = jax.lax.conv_general_dilated(
        x, weight, window_strides=(stride, stride),
        padding=[(padding, padding), (padding, padding)],
        dimension_numbers=("NCHW", "OIHW", "NCHW")) + bias[None, :, None, None]

    Ho = (H + 2 * padding - 3) // stride + 1
    Wo = (W + 2 * padding - 3) // stride + 1
    assert out.shape == (B, Cout, Ho, Wo), out.shape
    assert bool(jnp.all(jnp.isfinite(out)))
    max_err = float(jnp.max(jnp.abs(out - ref)))
    assert max_err < 1e-1, max_err
    print("KERNEL_OK")
</pallas_src>

<mosaic_0001>
module attributes {stable_mosaic.version = 11 : i64} {
  func.func @_conv_mm_kernel(%arg0: i32, %arg1: i32, %arg2: memref<48x128xbf16, #tpu.memory_space<vmem>>, %arg3: memref<32x48xbf16, #tpu.memory_space<vmem>>, %arg4: memref<32x1xf32, #tpu.memory_space<vmem>>, %arg5: memref<32x128xf32, #tpu.memory_space<vmem>>, %arg6: memref<32x128xf32, #tpu.memory_space<vmem>>) attributes {dimension_semantics = [#tpu.dimension_semantics<parallel>, #tpu.dimension_semantics<arbitrary>], iteration_bounds = array<i64: 1, 1>, scalar_prefetch = 0 : i64, scratch_operands = 1 : i64, tpu.core_type = #tpu.core_type<tc>, window_params = [{transform_indices = @transform_0, window_bounds = array<i64: 48, 128>}, {transform_indices = @transform_1, window_bounds = array<i64: 32, 48>}, {pipeline_mode = #tpu.pipeline_mode<synchronous>, transform_indices = @transform_2, window_bounds = array<i64: 32, 1>}, {transform_indices = @transform_3, window_bounds = array<i64: 32, 128>}]} {
    %c0_i32 = arith.constant 0 : i32
    %0 = arith.cmpi eq, %arg1, %c0_i32 : i32
    %1 = arith.extui %0 : i1 to i32
    %c0_i32_0 = arith.constant 0 : i32
    %2 = arith.cmpi ne, %1, %c0_i32_0 : i32
    scf.if %2 {
      %cst_10 = arith.constant 0.000000e+00 : f32
      %12 = vector.broadcast %cst_10 : f32 to vector<32x128xf32>
      %c0_11 = arith.constant 0 : index
      %c0_12 = arith.constant 0 : index
      %13 = vector.load %arg6[%c0_11, %c0_12] : memref<32x128xf32, #tpu.memory_space<vmem>>, vector<32x128xf32>
      tpu.vector_store %arg6[%c0_11, %c0_12], %12 {strides = array<i32>} : memref<32x128xf32, #tpu.memory_space<vmem>>, vector<32x128xf32>,
    } else {
    }
    %c0 = arith.constant 0 : index
    %c0_1 = arith.constant 0 : index
    %3 = vector.load %arg6[%c0, %c0_1] : memref<32x128xf32, #tpu.memory_space<vmem>>, vector<32x128xf32>
    %c0_2 = arith.constant 0 : index
    %c0_3 = arith.constant 0 : index
    %4 = vector.load %arg3[%c0_2, %c0_3] : memref<32x48xbf16, #tpu.memory_space<vmem>>, vector<32x48xbf16>
    %c0_4 = arith.constant 0 : index
    %c0_5 = arith.constant 0 : index
    %5 = vector.load %arg2[%c0_4, %c0_5] : memref<48x128xbf16, #tpu.memory_space<vmem>>, vector<48x128xbf16>
    %cst = arith.constant dense<0.000000e+00> : vector<32x128xf32>
    %6 = tpu.matmul %4, %5, %cst {dimension_numbers = #tpu.dot_dimension_numbers<[1], [0], [0], [1], [0, 0, 1, 1], [], []>} : vector<32x48xbf16>, vector<48x128xbf16>, vector<32x128xf32> -> vector<32x128xf32>
    %7 = arith.addf %3, %6 : vector<32x128xf32>
    %c0_6 = arith.constant 0 : index
    %c0_7 = arith.constant 0 : index
    %8 = vector.load %arg6[%c0_6, %c0_7] : memref<32x128xf32, #tpu.memory_space<vmem>>, vector<32x128xf32>
    tpu.vector_store %arg6[%c0_6, %c0_7], %7 {strides = array<i32>} : memref<32x128xf32, #tpu.memory_space<vmem>>, vector<32x128xf32>,
    %c0_i32_8 = arith.constant 0 : i32
    %9 = arith.cmpi eq, %arg1, %c0_i32_8 : i32
    %10 = arith.extui %9 : i1 to i32
    %c0_i32_9 = arith.constant 0 : i32
    %11 = arith.cmpi ne, %10, %c0_i32_9 : i32
    scf.if %11 {
      %c0_10 = arith.constant 0 : index
      %c0_11 = arith.constant 0 : index
      %12 = vector.load %arg6[%c0_10, %c0_11] : memref<32x128xf32, #tpu.memory_space<vmem>>, vector<32x128xf32>
      %c0_12 = arith.constant 0 : index
      %c0_13 = arith.constant 0 : index
      %13 = vector.load %arg4[%c0_12, %c0_13] : memref<32x1xf32, #tpu.memory_space<vmem>>, vector<32x1xf32>
      %14 = vector.broadcast %13 : vector<32x1xf32> to vector<32x128xf32>
      %15 = arith.addf %12, %14 : vector<32x128xf32>
      %c0_14 = arith.constant 0 : index
      %c0_15 = arith.constant 0 : index
      %16 = vector.load %arg5[%c0_14, %c0_15] : memref<32x128xf32, #tpu.memory_space<vmem>>, vector<32x128xf32>
      tpu.vector_store %arg5[%c0_14, %c0_15], %15 {strides = array<i32>} : memref<32x128xf32, #tpu.memory_space<vmem>>, vector<32x128xf32>,
    } else {
    }
    return
  }
  func.func @transform_0(%arg0: i32, %arg1: i32) -> (i32, i32) {
    %c0_i32 = arith.constant 0 : i32
    return %arg1, %arg0 : i32, i32
  }
  func.func @transform_1(%arg0: i32, %arg1: i32) -> (i32, i32) {
    %c0_i32 = arith.constant 0 : i32
    %c0_i32_0 = arith.constant 0 : i32
    return %c0_i32, %arg1 : i32, i32
  }
  func.func @transform_2(%arg0: i32, %arg1: i32) -> (i32, i32) {
    %c0_i32 = arith.constant 0 : i32
    %c0_i32_0 = arith.constant 0 : i32
    %c0_i32_1 = arith.constant 0 : i32
    return %c0_i32, %c0_i32_0 : i32, i32
  }
  func.func @transform_3(%arg0: i32, %arg1: i32) -> (i32, i32) {
    %c0_i32 = arith.constant 0 : i32
    %c0_i32_0 = arith.constant 0 : i32
    return %c0_i32, %arg0 : i32, i32
  }
}

</mosaic_0001>

<llo_original>
// kernel: downsample_block_forward.1
$region0: #{downsample_block_forward.1}
  #allocation0 [shape = 'u32[]', space=smem, size = 0x4, offset = 0x4, fixed_abs, tag = 'smem constant byte address 0x4 - core index']
  #allocation1 [shape = 'u32[144,128]{1,0:T(1,128)}', space=vmem, size = 0x12000, scoped, tag = 'internal scratch']
  #allocation2 [shape = 'f32[32,128]{1,0:T(8,128)}', space=vmem, size = 0x4000, scoped, tag = 'scratch operand']
  %s0 = inlined_call_operand.vmem [shape: bf16[48,128], index: 0, kind: input, shape index: {}]
  %s1 = inlined_call_operand.vmem [shape: bf16[32,48], index: 1, kind: input, shape index: {}]
  %s2 = inlined_call_operand.vmem [shape: f32[32,1], index: 2, kind: input, shape index: {}]
  %s3 = inlined_call_operand.vmem [shape: f32[32,128], index: 3, kind: output, shape index: {}]
  %s4 = sld [smem:[#allocation0]]
  $region30: #{downsample_block_forward.1} parent=0
    _
  %s6 = ssub.s32 1, %s4
  %s7 = scalar_select 0, %s6, %s4
  // Predicated region
  $region2: #{downsample_block_forward.1} parent=0 // pred_check
    _
  $region3: #{downsample_block_forward.1} parent=0 // pred_check_branch
    %9 = sbr.rel (0) target = $region5
  $region4: #{downsample_block_forward.1} parent=0 // pred_region
    _
  $region5: #{downsample_block_forward.1} parent=0 // pred_fallthru
    _
  // Predicated region
  $region6: #{downsample_block_forward.1} parent=0 // pred_check
    _
  $region7: #{downsample_block_forward.1} parent=0 // pred_check_branch
    %11 = sbr.rel (0) target = $region9
  $region8: #{downsample_block_forward.1} parent=0 // pred_region
    _
  $region9: #{downsample_block_forward.1} parent=0 // pred_fallthru
    _
  // Predicated region
  $region10: #{downsample_block_forward.1} parent=0 // pred_check
    _
  $region11: #{downsample_block_forward.1} parent=0 // pred_check_branch
    %13 = sbr.rel (0) target = $region13
  $region12: #{downsample_block_forward.1} parent=0 // pred_region
    _
  $region13: #{downsample_block_forward.1} parent=0 // pred_fallthru
    _
  %p15 = scmp.eq.s32.totalorder 0, 0
  // Predicated region
  $region14: #{downsample_block_forward.1} parent=0 // pred_check
    %p16 = pneg %p15
  $region15: #{downsample_block_forward.1} parent=0 // pred_check_branch
    %18 = sbr.rel (%p16) target = $region17
  $region16: #{downsample_block_forward.1} parent=0 // pred_region
    %19 = vst [vmem:[#allocation2] sm:$0xff] 0.0
    %20 = vst [vmem:[#allocation2 + $0x8] sm:$0xff] 0.0
    %21 = vst [vmem:[#allocation2 + $0x10] sm:$0xff] 0.0
    %22 = vst [vmem:[#allocation2 + $0x18] sm:$0xff] 0.0
  $region17: #{downsample_block_forward.1} parent=0 // pred_fallthru
    _
  %v23 = vld [vmem:[#allocation2] sm:$0xff]
  %v24 = vld [vmem:[#allocation2 + $0x8] sm:$0xff]
  %v25 = vld [vmem:[#allocation2 + $0x10] sm:$0xff]
  %v26 = vld [vmem:[#allocation2 + $0x18] sm:$0xff]
  %v27 = vld [vmem:[%s1] sm:$0xf]
  %v28 = vld [vmem:[%s1 + $0x4] sm:$0xf]
  %v29 = vld [vmem:[%s1 + $0x8] sm:$0xf]
  %v30 = vld [vmem:[%s1 + $0xc] sm:$0xf]
  %v31 = vld [vmem:[%s0] sm:$0xf]
  %v32 = vld [vmem:[%s0 + $0x4] sm:$0xf]
  %v33 = vld [vmem:[%s0 + $0x8] sm:$0xf]
  %v34 = vld [vmem:[%s0 + $0xc] sm:$0xf]
  %v35 = vld [vmem:[%s0 + $0x10] sm:$0xf]
  %v36 = vld [vmem:[%s0 + $0x14] sm:$0xf]
  %v41 = vunpack.c.l.b16 %v27
  %v42 = vunpack.c.l.b16 %v28
  %v43 = vunpack.c.l.b16 %v29
  %v44 = vunpack.c.l.b16 %v30
  %v45 = vpack.c.b16 %v42, %v41
  %v46 = vpack.c.b16 %v44, %v43
  %v53 = vunpack.c.l.b16 %v31
  %v54 = vunpack.c.l.b16 %v32
  %v55 = vunpack.c.l.b16 %v33
  %v56 = vunpack.c.l.b16 %v34
  %v57 = vunpack.c.l.b16 %v35
  %v58 = vunpack.c.l.b16 %v36
  %v59 = vpack.c.b16 %v54, %v53
  %v60 = vpack.c.b16 %v56, %v55
  %v61 = vpack.c.b16 %v58, %v57
  %vm65 = vcmask 392192
  %v67 = vsel %vm65, %v45, 0
  %v70 = vsel %vm65, %v46, 0
  %72 = vmatprep.subr.bf16.mxu0 0
  %73 = vmatpush1.bf16.msra.mxu0 %v59
  %74 = vmatprep.subr.bf16.mxu0 0
  %75 = vmatpush1.bf16.msra.mxu0 %v60
  %76 = vmatprep.subr.bf16.mxu0 0
  %77 = vmatpush1.bf16.msra.mxu0 %v61
  %78 = vmatprep.subr.bf16.mxu0 0
  %79 = vmatpush1.bf16.msra.mxu0 0
  %80 = vmatprep.subr.bf16.mxu0 0
  %81 = vmatpush1.bf16.msra.mxu0 0
  %82 = vmatprep.subr.bf16.mxu0 0
  %83 = vmatpush1.bf16.msra.mxu0 0
  %84 = vmatprep.subr.bf16.mxu0 0
  %85 = vmatpush1.bf16.msra.mxu0 0
  %86 = vmatprep.subr.bf16.mxu0 0
  %87 = vmatpush1.bf16.msra.mxu0 0
  %88 = vmatprep.subr.bf16.mxu0 0
  %89 = vmatpush1.bf16.msra.mxu0 0
  %90 = vmatprep.subr.bf16.mxu0 0
  %91 = vmatpush1.bf16.msra.mxu0 0
  %92 = vmatprep.subr.bf16.mxu0 0
  %93 = vmatpush1.bf16.msra.mxu0 0
  %94 = vmatprep.subr.bf16.mxu0 0
  %95 = vmatpush1.bf16.msra.mxu0 0
  %96 = vmatprep.subr.bf16.mxu0 0
  %97 = vmatpush1.bf16.msra.mxu0 0
  %98 = vmatprep.subr.bf16.mxu0 0
  %99 = vmatpush1.bf16.msra.mxu0 0
  %100 = vmatprep.subr.bf16.mxu0 0
  %101 = vmatpush1.bf16.msra.mxu0 0
  %102 = vmatprep.subr.bf16.mxu0 0
  %103 = vmatpush1.bf16.msra.mxu0 0
  %104 = vmatprep.mubr.bf16.mxu0 0
  %105 = vmatmul.mubr.bf16.gmra.mrb[0].mxu0 %v67
  %v106 = vpop.f32.mrb[0].mxu0
  %v107 = vadd.f32 0.0, %v106
  %v108 = vpop.f32.mrb[0].mxu0
  %v109 = vpop.f32.mrb[0].mxu0
  %v110 = vadd.f32 0.0, %v109
  %v111 = vpop.f32.mrb[0].mxu0
  %112 = vmatprep.mubr.bf16.mxu0 0
  %113 = vmatmul.mubr.bf16.gmra.mrb[0].mxu0 %v70
  %v114 = vpop.f32.mrb[0].mxu0
  %v115 = vadd.f32 0.0, %v114
  %v116 = vpop.f32.mrb[0].mxu0
  %v117 = vpop.f32.mrb[0].mxu0
  %v118 = vadd.f32 0.0, %v117
  %v119 = vpop.f32.mrb[0].mxu0
  %120 = vdwg.mxu0
  %v121 = vadd.f32 %v23, %v107
  %v122 = vadd.f32 %v24, %v110
  %v123 = vadd.f32 %v25, %v115
  %v124 = vadd.f32 %v26, %v118
  %125 = vst [vmem:[#allocation2] sm:$0xff] %v121
  %126 = vst [vmem:[#allocation2 + $0x8] sm:$0xff] %v122
  %127 = vst [vmem:[#allocation2 + $0x10] sm:$0xff] %v123
  %128 = vst [vmem:[#allocation2 + $0x18] sm:$0xff] %v124
  // Predicated region
  $region18: #{downsample_block_forward.1} parent=0 // pred_check
    %p129 = pneg %p15
  $region19: #{downsample_block_forward.1} parent=0 // pred_check_branch
    %131 = sbr.rel (%p129) target = $region21
  $region20: #{downsample_block_forward.1} parent=0 // pred_region
    %v132 = vld [vmem:[#allocation2] sm:$0xff]
    %v133 = vld [vmem:[#allocation2 + $0x8] sm:$0xff]
    %v134 = vld [vmem:[#allocation2 + $0x10] sm:$0xff]
    %v135 = vld [vmem:[#allocation2 + $0x18] sm:$0xff]
    %v136 = vld [vmem:[%s2] sm:$0xff]
    %v137 = vld [vmem:[%s2 + $0x8] sm:$0xff]
    %v138 = vld [vmem:[%s2 + $0x10] sm:$0xff]
    %v139 = vld [vmem:[%s2 + $0x18] sm:$0xff]
    %141 = vset.pattern.permute.xlu0 0
    %142 = vperm.xlu0 %141, %v136
    %v143 = vpop.permute.xlu0 %142
    %146 = vset.pattern.permute.xlu0 0
    %147 = vperm.xlu0 %146, %v137
    %v148 = vpop.permute.xlu0 %147
    %151 = vset.pattern.permute.xlu0 0
    %152 = vperm.xlu0 %151, %v138
    %v153 = vpop.permute.xlu0 %152
    %156 = vset.pattern.permute.xlu0 0
    %157 = vperm.xlu0 %156, %v139
    %v158 = vpop.permute.xlu0 %157
    %v160 = vadd.f32 %v132, %v143
    %v161 = vadd.f32 %v133, %v148
    %v162 = vadd.f32 %v134, %v153
    %v163 = vadd.f32 %v135, %v158
    %164 = vst [vmem:[%s3] sm:$0xff] %v160
    %165 = vst [vmem:[%s3 + $0x8] sm:$0xff] %v161
    %166 = vst [vmem:[%s3 + $0x10] sm:$0xff] %v162
    %167 = vst [vmem:[%s3 + $0x18] sm:$0xff] %v163
  $region21: #{downsample_block_forward.1} parent=0 // pred_fallthru
    _
  // Predicated region
  $region22: #{downsample_block_forward.1} parent=0 // pred_check
    _
  $region23: #{downsample_block_forward.1} parent=0 // pred_check_branch
    %169 = sbr.rel (0) target = $region25
  $region24: #{downsample_block_forward.1} parent=0 // pred_region
    _
  $region25: #{downsample_block_forward.1} parent=0 // pred_fallthru
    _
  // Predicated region
  $region26: #{downsample_block_forward.1} parent=0 // pred_check
    _
  $region27: #{downsample_block_forward.1} parent=0 // pred_check_branch
    %171 = sbr.rel (0) target = $region29
  $region28: #{downsample_block_forward.1} parent=0 // pred_region
    _
  $region29: #{downsample_block_forward.1} parent=0 // pred_fallthru
    _

</llo_original>
